<compile_context>
chip_gen: v7x
topology: tpu7x:2x2x1
jax: 0.10.0
libtpu: 0.0.40
codegen_flags: <defaults>
</compile_context>

<pallas_src>
import functools

import jax
import jax.numpy as jnp
import numpy as np
from jax.experimental import pallas as pl
from jax.experimental.pallas import tpu as pltpu


def _mixing_matrix(KC):
    """(KC, KC) bf16 Haar column-mixing tile (entries are exactly +-0.5).

    For a row-chunk v of width KC:  v @ M = [pair-sums/2 | pair-diffs/2], i.e.
    columns [:KC//2] give (v[:, 2j] + v[:, 2j+1]) / 2 and columns [KC//2:]
    give (v[:, 2j+1] - v[:, 2j]) / 2.  The reference's /2 scaling is folded in.
    """
    wc = KC // 2
    m = np.zeros((KC, KC), dtype=np.float32)
    j = np.arange(wc)
    m[2 * j, j] = 0.5
    m[2 * j + 1, j] = 0.5
    m[2 * j, wc + j] = -0.5
    m[2 * j + 1, wc + j] = 0.5
    return jnp.asarray(m, dtype=jnp.bfloat16)   # +-0.5 is exact in bf16


def _mix(v, mt, n_splits):
    """v @ mt with f32 accumulation on the MXU.

    f32 inputs: exact 3-way bf16 decomposition of v (bf16x3 == Precision.HIGH),
    accumulated over three native single-pass bf16 matmuls -- half the MXU
    passes of Precision.HIGHEST, bit-faithful to ~1 ulp since mt is +-0.5.
    bf16 inputs: one native pass.
    """
    if n_splits == 1:
        return jnp.dot(v.astype(mt.dtype), mt, preferred_element_type=jnp.float32)
    acc = None
    rem = v
    for s in range(n_splits):
        part = rem.astype(jnp.bfloat16)
        if s + 1 < n_splits:
            rem = rem - part.astype(jnp.float32)
        t = jnp.dot(part, mt, preferred_element_type=jnp.float32)
        acc = t if acc is None else acc + t
    return acc


def _dwt_kernel(x_ref, m_ref, o_ref, *, n_splits):
    # x_ref: (R, 2*W)   R = B*h rows; each row = [even image row | odd image row]
    #                   of one row-pair of one plane (fused polyphase view).
    # m_ref: (KC, KC)   constant bf16 Haar column-mixing tile.
    # o_ref: (4, R, w)  LL / HL / LH / HH slabs for the same rows.
    W = x_ref.shape[1] // 2
    KC = m_ref.shape[0]
    wc = KC // 2
    n_chunks = W // KC
    mt = m_ref[...]

    # Static (unrolled) loop over column chunks: bounds the MXU K dimension at
    # KC (<=256) and keeps all per-chunk intermediates tiny in VMEM.
    for c in range(n_chunks):
        k0 = c * KC
        xe = x_ref[:, k0:k0 + KC]             # even rows, this column chunk
        xo = x_ref[:, W + k0:W + k0 + KC]     # odd rows, same columns
        a = xe + xo                           # row-sum  -> feeds LL / HL
        d = xo - xe                           # row-diff -> feeds LH / HH

        p = _mix(a, mt, n_splits)             # (R, KC) = [LL | HL] for chunk c
        q = _mix(d, mt, n_splits)             # (R, KC) = [LH | HH] for chunk c

        j0 = c * wc                           # lane-aligned (128-wide) when KC=256
        o_ref[0, :, j0:j0 + wc] = p[:, :wc].astype(o_ref.dtype)   # LL
        o_ref[1, :, j0:j0 + wc] = p[:, wc:].astype(o_ref.dtype)   # HL
        o_ref[2, :, j0:j0 + wc] = q[:, :wc].astype(o_ref.dtype)   # LH
        o_ref[3, :, j0:j0 + wc] = q[:, wc:].astype(o_ref.dtype)   # HH


def _choose_planes_per_step(NC, h, row_bytes, sublane, target_bytes=4 << 20):
    """Pick B = image planes per grid step.

    Constraints: B divides N*C; the block's second-minor dim B*h is a multiple
    of `sublane` (unless the block spans the full array); input block ~<= 4 MiB.
    Preference order: fits in budget, grid has an even number of steps >= 2
    (so the single "parallel" axis spans both v7x TensorCores), then largest B
    (amortizes the ~0.35 us per-step overhead on v5e/v6e).
    """
    legal = [b for b in range(1, NC + 1)
             if NC % b == 0 and ((b * h) % sublane == 0 or b == NC)]
    max_b = max(1, target_bytes // max(1, h * row_bytes))
    fitting = [b for b in legal if b <= max_b]
    if not fitting:
        return min(legal)   # degenerate shapes only: smallest legal block

    def key(b):
        g = NC // b
        return (g >= 2 and g % 2 == 0, g >= 2, b)

    return max(fitting, key=key)


def dwt(x):
    """Pallas DWT forward. x: (N, C, H, W) -> (4N, C, H//2, W//2)."""
    N, C, H, W = x.shape
    assert H % 2 == 0 and W % 2 == 0, "DWT requires even spatial dims"
    h, w = H // 2, W // 2
    NC = N * C

    itemsize = jnp.dtype(x.dtype).itemsize
    sublane = {4: 8, 2: 16, 1: 32}.get(itemsize, 8)
    B = _choose_planes_per_step(NC, h, 2 * W * itemsize, sublane)
    grid = (NC // B,)

    # MXU K-chunk: 256 gives lane-dense 128-wide output halves; fall back for
    # narrow / awkward widths (still correct, just masked stores on tiny data).
    if W % 256 == 0:
        KC = 256
    elif W % 128 == 0:
        KC = 128
    else:
        KC = W
    m = _mixing_matrix(KC)

    # f32 input: exact 3-way bf16 split (== Precision.HIGH); bf16: 1 native pass.
    n_splits = 3 if x.dtype == jnp.float32 else 1

    # Copy-free polyphase view: row r = [image row 2*(r%h) | image row 2*(r%h)+1]
    # of plane r // h, so even/odd rows are plain lane slices in the kernel.
    x2d = x.reshape(NC * h, 2 * W)

    block_bytes = B * h * 2 * W * itemsize
    out = pl.pallas_call(
        functools.partial(_dwt_kernel, n_splits=n_splits),
        out_shape=jax.ShapeDtypeStruct((4, NC * h, w), x.dtype),
        grid=grid,
        in_specs=[
            pl.BlockSpec((B * h, 2 * W), lambda i: (i, 0)),
            pl.BlockSpec((KC, KC), lambda i: (0, 0)),
        ],
        out_specs=pl.BlockSpec((4, B * h, w), lambda i: (0, i, 0)),
        compiler_params=pltpu.CompilerParams(
            dimension_semantics=("parallel",),
            # Normal case: ~2x(in)+2x(out) double-buffered blocks + small chunk
            # temporaries ~= 4-5x block_bytes << 32 MiB; scales up only for the
            # degenerate full-extent fallback so it still compiles.
            vmem_limit_bytes=max(32 * 1024 * 1024, 5 * block_bytes),
        ),
    )(x2d, m)

    # (4, N*C*h, w) -> (4N, C, h, w): copy-free reshape reproducing
    # torch.cat((LL, HL, LH, HH), dim=0) ordering.
    return out.reshape(4 * N, C, h, w)


def _dwt_ref(x):
    """Pure-JAX reference reproducing dwt_init semantics."""
    x01 = x[:, :, 0::2, :] / 2
    x02 = x[:, :, 1::2, :] / 2
    x1 = x01[:, :, :, 0::2]
    x2 = x02[:, :, :, 0::2]
    x3 = x01[:, :, :, 1::2]
    x4 = x02[:, :, :, 1::2]
    x_LL = x1 + x2 + x3 + x4
    x_HL = -x1 - x2 + x3 + x4
    x_LH = -x1 + x2 - x3 + x4
    x_HH = x1 - x2 - x3 + x4
    return jnp.concatenate((x_LL, x_HL, x_LH, x_HH), axis=0)


if __name__ == "__main__":
    key = jax.random.PRNGKey(0)
    N, C, H, W = 2, 4, 16, 16
    x = jax.random.normal(key, (N, C, H, W), dtype=jnp.float32)

    y = dwt(x)
    jax.block_until_ready(y)

    y_ref = _dwt_ref(x)
    assert y.shape == (4 * N, C, H // 2, W // 2), y.shape
    err = np.max(np.abs(np.asarray(y) - np.asarray(y_ref)))
    assert np.allclose(np.asarray(y), np.asarray(y_ref), atol=1e-5, rtol=1e-5), err

    print("KERNEL_OK")
</pallas_src>

<mosaic_0001>
module attributes {stable_mosaic.version = 11 : i64} {
  func.func @_dwt_kernel(%arg0: i32, %arg1: memref<32x32xf32, #tpu.memory_space<vmem>>, %arg2: memref<16x16xbf16, #tpu.memory_space<vmem>>, %arg3: memref<4x32x8xf32, #tpu.memory_space<vmem>>) attributes {dimension_semantics = [#tpu.dimension_semantics<parallel>], iteration_bounds = array<i64: 2>, scalar_prefetch = 0 : i64, scratch_operands = 0 : i64, tpu.core_type = #tpu.core_type<tc>, window_params = [{transform_indices = @transform_0, window_bounds = array<i64: 32, 32>}, {pipeline_mode = #tpu.pipeline_mode<synchronous>, transform_indices = @transform_1, window_bounds = array<i64: 16, 16>}, {transform_indices = @transform_2, window_bounds = array<i64: 4, 32, 8>}]} {
    %c0 = arith.constant 0 : index
    %c0_0 = arith.constant 0 : index
    %0 = vector.load %arg2[%c0, %c0_0] : memref<16x16xbf16, #tpu.memory_space<vmem>>, vector<16x16xbf16>
    %c0_1 = arith.constant 0 : index
    %c0_2 = arith.constant 0 : index
    %1 = vector.load %arg1[%c0_1, %c0_2] : memref<32x32xf32, #tpu.memory_space<vmem>>, vector<32x16xf32>
    %c0_3 = arith.constant 0 : index
    %c16 = arith.constant 16 : index
    %2 = vector.load %arg1[%c0_3, %c16] : memref<32x32xf32, #tpu.memory_space<vmem>>, vector<32x16xf32>
    %3 = arith.addf %1, %2 : vector<32x16xf32>
    %4 = arith.subf %2, %1 : vector<32x16xf32>
    %5 = arith.truncf %3 : vector<32x16xf32> to vector<32x16xbf16>
    %6 = arith.extf %5 : vector<32x16xbf16> to vector<32x16xf32>
    %7 = arith.subf %3, %6 : vector<32x16xf32>
    %cst = arith.constant dense<0.000000e+00> : vector<32x16xf32>
    %8 = tpu.matmul %5, %0, %cst {dimension_numbers = #tpu.dot_dimension_numbers<[1], [0], [0], [1], [0, 0, 1, 1], [], []>} : vector<32x16xbf16>, vector<16x16xbf16>, vector<32x16xf32> -> vector<32x16xf32>
    %9 = arith.truncf %7 : vector<32x16xf32> to vector<32x16xbf16>
    %10 = arith.extf %9 : vector<32x16xbf16> to vector<32x16xf32>
    %11 = arith.subf %7, %10 : vector<32x16xf32>
    %cst_4 = arith.constant dense<0.000000e+00> : vector<32x16xf32>
    %12 = tpu.matmul %9, %0, %cst_4 {dimension_numbers = #tpu.dot_dimension_numbers<[1], [0], [0], [1], [0, 0, 1, 1], [], []>} : vector<32x16xbf16>, vector<16x16xbf16>, vector<32x16xf32> -> vector<32x16xf32>
    %13 = arith.addf %8, %12 : vector<32x16xf32>
    %14 = arith.truncf %11 : vector<32x16xf32> to vector<32x16xbf16>
    %cst_5 = arith.constant dense<0.000000e+00> : vector<32x16xf32>
    %15 = tpu.matmul %14, %0, %cst_5 {dimension_numbers = #tpu.dot_dimension_numbers<[1], [0], [0], [1], [0, 0, 1, 1], [], []>} : vector<32x16xbf16>, vector<16x16xbf16>, vector<32x16xf32> -> vector<32x16xf32>
    %16 = arith.addf %13, %15 : vector<32x16xf32>
    %17 = arith.truncf %4 : vector<32x16xf32> to vector<32x16xbf16>
    %18 = arith.extf %17 : vector<32x16xbf16> to vector<32x16xf32>
    %19 = arith.subf %4, %18 : vector<32x16xf32>
    %cst_6 = arith.constant dense<0.000000e+00> : vector<32x16xf32>
    %20 = tpu.matmul %17, %0, %cst_6 {dimension_numbers = #tpu.dot_dimension_numbers<[1], [0], [0], [1], [0, 0, 1, 1], [], []>} : vector<32x16xbf16>, vector<16x16xbf16>, vector<32x16xf32> -> vector<32x16xf32>
    %21 = arith.truncf %19 : vector<32x16xf32> to vector<32x16xbf16>
    %22 = arith.extf %21 : vector<32x16xbf16> to vector<32x16xf32>
    %23 = arith.subf %19, %22 : vector<32x16xf32>
    %cst_7 = arith.constant dense<0.000000e+00> : vector<32x16xf32>
    %24 = tpu.matmul %21, %0, %cst_7 {dimension_numbers = #tpu.dot_dimension_numbers<[1], [0], [0], [1], [0, 0, 1, 1], [], []>} : vector<32x16xbf16>, vector<16x16xbf16>, vector<32x16xf32> -> vector<32x16xf32>
    %25 = arith.addf %20, %24 : vector<32x16xf32>
    %26 = arith.truncf %23 : vector<32x16xf32> to vector<32x16xbf16>
    %cst_8 = arith.constant dense<0.000000e+00> : vector<32x16xf32>
    %27 = tpu.matmul %26, %0, %cst_8 {dimension_numbers = #tpu.dot_dimension_numbers<[1], [0], [0], [1], [0, 0, 1, 1], [], []>} : vector<32x16xbf16>, vector<16x16xbf16>, vector<32x16xf32> -> vector<32x16xf32>
    %28 = arith.addf %25, %27 : vector<32x16xf32>
    %29 = vector.extract_strided_slice %16 {offsets = [0, 0], sizes = [32, 8], strides = [1, 1]} : vector<32x16xf32> to vector<32x8xf32>
    %c0_9 = arith.constant 0 : index
    %c0_10 = arith.constant 0 : index
    %c0_11 = arith.constant 0 : index
    %30 = vector.load %arg3[%c0_9, %c0_10, %c0_11] : memref<4x32x8xf32, #tpu.memory_space<vmem>>, vector<1x32x8xf32>
    %31 = vector.shape_cast %30 : vector<1x32x8xf32> to vector<32x8xf32>
    %32 = vector.shape_cast %29 : vector<32x8xf32> to vector<1x32x8xf32>
    tpu.vector_store %arg3[%c0_9, %c0_10, %c0_11], %32 {strides = array<i32>} : memref<4x32x8xf32, #tpu.memory_space<vmem>>, vector<1x32x8xf32>,
    %33 = vector.extract_strided_slice %16 {offsets = [0, 8], sizes = [32, 8], strides = [1, 1]} : vector<32x16xf32> to vector<32x8xf32>
    %c1 = arith.constant 1 : index
    %c0_12 = arith.constant 0 : index
    %c0_13 = arith.constant 0 : index
    %34 = vector.load %arg3[%c1, %c0_12, %c0_13] : memref<4x32x8xf32, #tpu.memory_space<vmem>>, vector<1x32x8xf32>
    %35 = vector.shape_cast %34 : vector<1x32x8xf32> to vector<32x8xf32>
    %36 = vector.shape_cast %33 : vector<32x8xf32> to vector<1x32x8xf32>
    tpu.vector_store %arg3[%c1, %c0_12, %c0_13], %36 {strides = array<i32>} : memref<4x32x8xf32, #tpu.memory_space<vmem>>, vector<1x32x8xf32>,
    %37 = vector.extract_strided_slice %28 {offsets = [0, 0], sizes = [32, 8], strides = [1, 1]} : vector<32x16xf32> to vector<32x8xf32>
    %c2 = arith.constant 2 : index
    %c0_14 = arith.constant 0 : index
    %c0_15 = arith.constant 0 : index
    %38 = vector.load %arg3[%c2, %c0_14, %c0_15] : memref<4x32x8xf32, #tpu.memory_space<vmem>>, vector<1x32x8xf32>
    %39 = vector.shape_cast %38 : vector<1x32x8xf32> to vector<32x8xf32>
    %40 = vector.shape_cast %37 : vector<32x8xf32> to vector<1x32x8xf32>
    tpu.vector_store %arg3[%c2, %c0_14, %c0_15], %40 {strides = array<i32>} : memref<4x32x8xf32, #tpu.memory_space<vmem>>, vector<1x32x8xf32>,
    %41 = vector.extract_strided_slice %28 {offsets = [0, 8], sizes = [32, 8], strides = [1, 1]} : vector<32x16xf32> to vector<32x8xf32>
    %c3 = arith.constant 3 : index
    %c0_16 = arith.constant 0 : index
    %c0_17 = arith.constant 0 : index
    %42 = vector.load %arg3[%c3, %c0_16, %c0_17] : memref<4x32x8xf32, #tpu.memory_space<vmem>>, vector<1x32x8xf32>
    %43 = vector.shape_cast %42 : vector<1x32x8xf32> to vector<32x8xf32>
    %44 = vector.shape_cast %41 : vector<32x8xf32> to vector<1x32x8xf32>
    tpu.vector_store %arg3[%c3, %c0_16, %c0_17], %44 {strides = array<i32>} : memref<4x32x8xf32, #tpu.memory_space<vmem>>, vector<1x32x8xf32>,
    return
  }
  func.func @transform_0(%arg0: i32) -> (i32, i32) {
    %c0_i32 = arith.constant 0 : i32
    %c0_i32_0 = arith.constant 0 : i32
    return %arg0, %c0_i32 : i32, i32
  }
  func.func @transform_1(%arg0: i32) -> (i32, i32) {
    %c0_i32 = arith.constant 0 : i32
    %c0_i32_0 = arith.constant 0 : i32
    %c0_i32_1 = arith.constant 0 : i32
    return %c0_i32, %c0_i32_0 : i32, i32
  }
  func.func @transform_2(%arg0: i32) -> (i32, i32, i32) {
    %c0_i32 = arith.constant 0 : i32
    %c0_i32_0 = arith.constant 0 : i32
    %c0_i32_1 = arith.constant 0 : i32
    return %c0_i32, %arg0, %c0_i32_0 : i32, i32, i32
  }
}

</mosaic_0001>

<llo_original>
// kernel: tpu_custom_call.1
$region0: #{tpu_custom_call.1}
  #allocation0 [shape = 'u32[]', space=smem, size = 0x4, offset = 0x4, fixed_abs, tag = 'smem constant byte address 0x4 - core index']
  #allocation1 [shape = 'u32[144,128]{1,0:T(1,128)}', space=vmem, size = 0x12000, scoped, tag = 'internal scratch']
  %s0 = inlined_call_operand.vmem [shape: f32[64,32], index: 0, kind: input, shape index: {}]
  %s1 = inlined_call_operand.vmem [shape: bf16[16,16], index: 1, kind: input, shape index: {}]
  %s2 = inlined_call_operand.vmem [shape: f32[4,64,8], index: 2, kind: output, shape index: {}]
  %s3 = sld [smem:[#allocation0]]
  $region75: #{tpu_custom_call.1} parent=0
    _
  %s5 = ssub.s32 1, %s3
  %s6 = scalar_select 0, %s5, %s3
  $region1: #{tpu_custom_call.1} parent=0
    #allocation2 [shape = 'u8[131072]{0}', space=vmem, size = 0x20000, scoped, tag = 'output window, operand 0']
    loop: start=0, step=1, limit=4
    $region2: #{tpu_custom_call.1} parent=1 // loop_pre_header
      _
    $region3: #{tpu_custom_call.1} parent=1 // loop_header
      %s8 = sphi 0, %s12
      %p9 = scmp.ge.s32.totalorder %s8, 4
      %s18 = sphi 0, %s20
      %s21 = sphi 0, %s18
      %s22 = sphi 0, %s21
      %s38 = sphi 0, %s22
      %s42 = sphi 0, %s42
      %s44 = sphi 0, %s42
      %s45 = sphi 0, %s44
      %s59 = sphi 0, %s45
      %s65 = sphi 0, %s67
      %s68 = sphi 0, %s65
      %s69 = sphi 0, %s68
      %s85 = sphi 0, %s69
    $region4: #{tpu_custom_call.1} parent=1 // loop_header_branch
      %11 = sbr.rel (%p9) target = $region8
    $region5: #{tpu_custom_call.1} parent=1 // loop_body
      %s13 = ssub.s32 %s8, 1
      %s14 = ssub.s32 %s8, 2
      %s15 = sadd.s32 %s8, 1
      %s16 = ssub.s32 %s8, %s15
      %p17 = scmp.eq.s32.totalorder %s16, 0
      %s19 = sadd.s32 %s18, 1
      %s20 = scalar_select %p17, %s18, %s19
      %p23 = pneg %p17
      %p24 = scmp.eq.s32.totalorder %s8, 1
      %p25 = por %p23, %p24
      %p26 = scmp.ne.s32.totalorder %s18, %s21
      %p27 = scmp.eq.s32.totalorder %s8, 0
      %p28 = por %p26, %p27
      %p29 = scmp.ne.s32.totalorder %s18, %s21
      %p30 = scmp.eq.s32.totalorder %s13, 1
      %p31 = por %p29, %p30
      %p32 = scmp.ne.s32.totalorder %s21, %s22
      %p33 = scmp.eq.s32.totalorder %s13, 0
      %p34 = por %p32, %p33
      %p35 = scmp.ne.s32.totalorder %s21, %s22
      %p36 = scmp.eq.s32.totalorder %s14, 1
      %p37 = por %p35, %p36
      %p39 = scmp.ne.s32.totalorder %s22, %s38
      %p40 = scmp.eq.s32.totalorder %s14, 0
      %p41 = por %p39, %p40
      %s43 = sadd.s32 %s42, 1
      %p46 = scmp.eq.s32.totalorder %s8, 1
      %p47 = scmp.ne.s32.totalorder %s42, %s44
      %p48 = scmp.eq.s32.totalorder %s8, 0
      %p49 = por %p47, %p48
      %p50 = scmp.ne.s32.totalorder %s42, %s44
      %p51 = scmp.eq.s32.totalorder %s13, 1
      %p52 = por %p50, %p51
      %p53 = scmp.ne.s32.totalorder %s44, %s45
      %p54 = scmp.eq.s32.totalorder %s13, 0
      %p55 = por %p53, %p54
      %p56 = scmp.ne.s32.totalorder %s44, %s45
      %p57 = scmp.eq.s32.totalorder %s14, 1
      %p58 = por %p56, %p57
      %p60 = scmp.ne.s32.totalorder %s45, %s59
      %p61 = scmp.eq.s32.totalorder %s14, 0
      %p62 = por %p60, %p61
      %s63 = ssub.s32 %s8, %s15
      %p64 = scmp.eq.s32.totalorder %s63, 0
      %s66 = sadd.s32 %s65, 1
      %s67 = scalar_select %p64, %s65, %s66
      %p70 = pneg %p64
      %p71 = scmp.eq.s32.totalorder %s8, 1
      %p72 = por %p70, %p71
      %p73 = scmp.ne.s32.totalorder %s65, %s68
      %p74 = scmp.eq.s32.totalorder %s8, 0
      %p75 = por %p73, %p74
      %p76 = scmp.ne.s32.totalorder %s65, %s68
      %p77 = scmp.eq.s32.totalorder %s13, 1
      %p78 = por %p76, %p77
      %p79 = scmp.ne.s32.totalorder %s68, %s69
      %p80 = scmp.eq.s32.totalorder %s13, 0
      %p81 = por %p79, %p80
      %p82 = scmp.ne.s32.totalorder %s68, %s69
      %p83 = scmp.eq.s32.totalorder %s14, 1
      %p84 = por %p82, %p83
      %p86 = scmp.ne.s32.totalorder %s69, %s85
      %p87 = scmp.eq.s32.totalorder %s14, 0
      %p88 = por %p86, %p87
      %p89 = scmp.le.s32.totalorder 1, %s8
      %p90 = scmp.lt.s32.totalorder %s8, 3
      %p91 = pnand %p89, %p90
      %p92 = pneg %p91
      // Predicated region
      $region9: #{tpu_custom_call.1} parent=5 // pred_check
        _
      $region10: #{tpu_custom_call.1} parent=5 // pred_check_branch
        %94 = sbr.rel (%p91) target = $region12
      $region11: #{tpu_custom_call.1} parent=5 // pred_region
        %s95 = ssub.s32 %s8, 1
        // Predicated region
        $region13: #{tpu_custom_call.1} parent=11 // pred_check
          %p96 = pneg %p55
        $region14: #{tpu_custom_call.1} parent=11 // pred_check_branch
          %98 = sbr.rel (%p96) target = $region16
        $region15: #{tpu_custom_call.1} parent=11 // pred_region
          _
        $region16: #{tpu_custom_call.1} parent=11 // pred_fallthru
          _
      $region12: #{tpu_custom_call.1} parent=5 // pred_fallthru
        _
      %p99 = scmp.lt.s32.totalorder %s8, 2
      // Predicated region
      $region17: #{tpu_custom_call.1} parent=5 // pred_check
        %p100 = pneg %p99
      $region18: #{tpu_custom_call.1} parent=5 // pred_check_branch
        %102 = sbr.rel (%p100) target = $region20
      $region19: #{tpu_custom_call.1} parent=5 // pred_region
        // Predicated region
        $region21: #{tpu_custom_call.1} parent=19 // pred_check
          %p103 = pneg %p28
        $region22: #{tpu_custom_call.1} parent=19 // pred_check_branch
          %105 = sbr.rel (%p103) target = $region24
        $region23: #{tpu_custom_call.1} parent=19 // pred_region
          %s106 = smul.u32 4, %s8
          %p107 = scmp.lt.s32.totalorder %s106, 7
          %s108 = scalar_select %p107, %s106, 7
          %s109 = smul.addr %s108, 8
          %s110 = scalar_lea.vmem %s0, %s109
          %s111 = smul.u32 4, %s8
        $region24: #{tpu_custom_call.1} parent=19 // pred_fallthru
          _
      $region20: #{tpu_custom_call.1} parent=5 // pred_fallthru
        _
      %p112 = scmp.le.s32.totalorder 1, %s8
      %p113 = scmp.lt.s32.totalorder %s8, 3
      %p114 = pnand %p112, %p113
      %p115 = pneg %p114
      // Predicated region
      $region25: #{tpu_custom_call.1} parent=5 // pred_check
        _
      $region26: #{tpu_custom_call.1} parent=5 // pred_check_branch
        %117 = sbr.rel (%p114) target = $region28
      $region27: #{tpu_custom_call.1} parent=5 // pred_region
        %s118 = ssub.s32 %s8, 1
        %s119 = smul.u32 4, %s13
        %p120 = scmp.lt.s32.totalorder %s119, 7
        %s121 = scalar_select %p120, %s119, 7
        %s122 = smul.addr %s121, 8
        %s123 = scalar_lea.vmem %s0, %s122
        %p124 = pneg %p34
        %p125 = pneg %p31
        %p126 = pneg %p55
        %p127 = pneg %p52
        %p128 = pneg %p81
        %p129 = pneg %p78
        %s130 = sand.u32 %s68, 1
        %s131 = sand.u32 %s68, 1
        %s132 = smul.addr %s131, 128
        %s133 = scalar_lea.vmem [#allocation2], %s132
        %s134 = smul.u32 4, %s13
        %p135 = scmp.lt.s32.totalorder %s134, 7
        %s136 = scalar_select %p135, %s134, 7
        %s137 = smul.addr %s136, 8
        %s138 = scalar_lea.vmem %s0, %s137
        %s139 = smul.u32 4, %s13
        %s140 = smul.u32 4, %s13
        %v142 = vld [vmem:[%s1] sm:$0xf]
        %v143 = vld [vmem:[%s1 + $0x4] sm:$0xf]
        %v144 = vld [vmem:[%s138] sm:$0xff]
        %v145 = vld [vmem:[%s138 + $0x8] sm:$0xff]
        %v146 = vld [vmem:[%s138 + $0x10] sm:$0xff]
        %v147 = vld [vmem:[%s138 + $0x18] sm:$0xff]
        %152 = vrot.lane.b32.xlu0 %v144, 112
        %v153 = vpop.permute.xlu0 %152
        %154 = vrot.lane.b32.xlu0 %v145, 112
        %v155 = vpop.permute.xlu0 %154
        %156 = vrot.lane.b32.xlu0 %v146, 112
        %v157 = vpop.permute.xlu0 %156
        %158 = vrot.lane.b32.xlu0 %v147, 112
        %v159 = vpop.permute.xlu0 %158
        %v164 = vadd.f32 %v144, %v153
        %v165 = vadd.f32 %v145, %v155
        %v166 = vadd.f32 %v146, %v157
        %v167 = vadd.f32 %v147, %v159
        %168 = vrot.lane.b32.xlu0 %v144, 16
        %v169 = vpop.permute.xlu0 %168
        %170 = vrot.lane.b32.xlu0 %v145, 16
        %v171 = vpop.permute.xlu0 %170
        %172 = vrot.lane.b32.xlu0 %v146, 16
        %v173 = vpop.permute.xlu0 %172
        %174 = vrot.lane.b32.xlu0 %v147, 16
        %v175 = vpop.permute.xlu0 %174
        %v180 = vsub.f32 %v144, %v169
        %v181 = vsub.f32 %v145, %v171
        %v182 = vsub.f32 %v146, %v173
        %v183 = vsub.f32 %v147, %v175
        %v184 = vpack.c.bf16 %v165, %v164
        %v185 = vpack.c.bf16 %v167, %v166
        %v186 = vunpack.c.l.bf16 %v184
        %v187 = vunpack.c.h.bf16 %v184
        %v188 = vunpack.c.l.bf16 %v185
        %v189 = vunpack.c.h.bf16 %v185
        %v190 = vsub.f32 %v164, %v186
        %v191 = vsub.f32 %v165, %v187
        %v192 = vsub.f32 %v166, %v188
        %v193 = vsub.f32 %v167, %v189
        %v194 = vpack.c.bf16 %v191, %v190
        %v195 = vpack.c.bf16 %v193, %v192
        %v196 = vunpack.c.l.bf16 %v194
        %v197 = vunpack.c.h.bf16 %v194
        %v198 = vunpack.c.l.bf16 %v195
        %v199 = vunpack.c.h.bf16 %v195
        %v200 = vsub.f32 %v190, %v196
        %v201 = vsub.f32 %v191, %v197
        %v202 = vsub.f32 %v192, %v198
        %v203 = vsub.f32 %v193, %v199
        %v206 = vunpack.c.l.b16 %v142
        %v207 = vunpack.c.l.b16 %v143
        %v208 = vpack.c.b16 %v207, %v206
        %vm210 = vcmask 130048
        %v212 = vsel %vm210, %v194, 0
        %v215 = vsel %vm210, %v195, 0
        %217 = vmatprep.subr.bf16.mxu0 0
        %218 = vmatpush1.bf16.msra.mxu0 %v208
        %219 = vmatprep.subr.bf16.mxu0 0
        %220 = vmatpush1.bf16.msra.mxu0 0
        %221 = vmatprep.subr.bf16.mxu0 0
        %222 = vmatpush1.bf16.msra.mxu0 0
        %223 = vmatprep.subr.bf16.mxu0 0
        %224 = vmatpush1.bf16.msra.mxu0 0
        %225 = vmatprep.subr.bf16.mxu0 0
        %226 = vmatpush1.bf16.msra.mxu0 0
        %227 = vmatprep.subr.bf16.mxu0 0
        %228 = vmatpush1.bf16.msra.mxu0 0
        %229 = vmatprep.subr.bf16.mxu0 0
        %230 = vmatpush1.bf16.msra.mxu0 0
        %231 = vmatprep.subr.bf16.mxu0 0
        %232 = vmatpush1.bf16.msra.mxu0 0
        %233 = vmatprep.subr.bf16.mxu0 0
        %234 = vmatpush1.bf16.msra.mxu0 0
        %235 = vmatprep.subr.bf16.mxu0 0
        %236 = vmatpush1.bf16.msra.mxu0 0
        %237 = vmatprep.subr.bf16.mxu0 0
        %238 = vmatpush1.bf16.msra.mxu0 0
        %239 = vmatprep.subr.bf16.mxu0 0
        %240 = vmatpush1.bf16.msra.mxu0 0
        %241 = vmatprep.subr.bf16.mxu0 0
        %242 = vmatpush1.bf16.msra.mxu0 0
        %243 = vmatprep.subr.bf16.mxu0 0
        %244 = vmatpush1.bf16.msra.mxu0 0
        %245 = vmatprep.subr.bf16.mxu0 0
        %246 = vmatpush1.bf16.msra.mxu0 0
        %247 = vmatprep.subr.bf16.mxu0 0
        %248 = vmatpush1.bf16.msra.mxu0 0
        %249 = vmatprep.mubr.bf16.mxu0 0
        %250 = vmatmul.mubr.bf16.gmra.mrb[0].mxu0 %v212
        %v251 = vpop.f32.mrb[0].mxu0
        %v252 = vadd.f32 0.0, %v251
        %v253 = vpop.f32.mrb[0].mxu0
        %v254 = vpop.f32.mrb[0].mxu0
        %v255 = vadd.f32 0.0, %v254
        %v256 = vpop.f32.mrb[0].mxu0
        %257 = vmatprep.mubr.bf16.mxu0 0
        %258 = vmatmul.mubr.bf16.gmra.mrb[0].mxu0 %v215
        %v259 = vpop.f32.mrb[0].mxu0
        %v260 = vadd.f32 0.0, %v259
        %v261 = vpop.f32.mrb[0].mxu0
        %v262 = vpop.f32.mrb[0].mxu0
        %v263 = vadd.f32 0.0, %v262
        %v264 = vpop.f32.mrb[0].mxu0
        %265 = vdwg.mxu0
        %v267 = vsel %vm210, %v184, 0
        %v270 = vsel %vm210, %v185, 0
        %272 = vmatprep.subr.bf16.mxu0 0
        %273 = vmatpush1.bf16.msra.mxu0 %v208
        %274 = vmatprep.subr.bf16.mxu0 0
        %275 = vmatpush1.bf16.msra.mxu0 0
        %276 = vmatprep.subr.bf16.mxu0 0
        %277 = vmatpush1.bf16.msra.mxu0 0
        %278 = vmatprep.subr.bf16.mxu0 0
        %279 = vmatpush1.bf16.msra.mxu0 0
        %280 = vmatprep.subr.bf16.mxu0 0
        %281 = vmatpush1.bf16.msra.mxu0 0
        %282 = vmatprep.subr.bf16.mxu0 0
        %283 = vmatpush1.bf16.msra.mxu0 0
        %284 = vmatprep.subr.bf16.mxu0 0
        %285 = vmatpush1.bf16.msra.mxu0 0
        %286 = vmatprep.subr.bf16.mxu0 0
        %287 = vmatpush1.bf16.msra.mxu0 0
        %288 = vmatprep.subr.bf16.mxu0 0
        %289 = vmatpush1.bf16.msra.mxu0 0
        %290 = vmatprep.subr.bf16.mxu0 0
        %291 = vmatpush1.bf16.msra.mxu0 0
        %292 = vmatprep.subr.bf16.mxu0 0
        %293 = vmatpush1.bf16.msra.mxu0 0
        %294 = vmatprep.subr.bf16.mxu0 0
        %295 = vmatpush1.bf16.msra.mxu0 0
        %296 = vmatprep.subr.bf16.mxu0 0
        %297 = vmatpush1.bf16.msra.mxu0 0
        %298 = vmatprep.subr.bf16.mxu0 0
        %299 = vmatpush1.bf16.msra.mxu0 0
        %300 = vmatprep.subr.bf16.mxu0 0
        %301 = vmatpush1.bf16.msra.mxu0 0
        %302 = vmatprep.subr.bf16.mxu0 0
        %303 = vmatpush1.bf16.msra.mxu0 0
        %304 = vmatprep.mubr.bf16.mxu0 0
        %305 = vmatmul.mubr.bf16.gmra.mrb[0].mxu0 %v267
        %v306 = vpop.f32.mrb[0].mxu0
        %v307 = vadd.f32 %v252, %v306
        %v308 = vpop.f32.mrb[0].mxu0
        %v309 = vpop.f32.mrb[0].mxu0
        %v310 = vadd.f32 %v255, %v309
        %v311 = vpop.f32.mrb[0].mxu0
        %312 = vmatprep.mubr.bf16.mxu0 0
        %313 = vmatmul.mubr.bf16.gmra.mrb[0].mxu0 %v270
        %v314 = vpop.f32.mrb[0].mxu0
        %v315 = vadd.f32 %v260, %v314
        %v316 = vpop.f32.mrb[0].mxu0
        %v317 = vpop.f32.mrb[0].mxu0
        %v318 = vadd.f32 %v263, %v317
        %v319 = vpop.f32.mrb[0].mxu0
        %320 = vdwg.mxu0
        %v321 = vpack.c.bf16 %v201, %v200
        %v322 = vpack.c.bf16 %v203, %v202
        %v324 = vsel %vm210, %v321, 0
        %v327 = vsel %vm210, %v322, 0
        %329 = vmatprep.subr.bf16.mxu0 0
        %330 = vmatpush1.bf16.msra.mxu0 %v208
        %331 = vmatprep.subr.bf16.mxu0 0
        %332 = vmatpush1.bf16.msra.mxu0 0
        %333 = vmatprep.subr.bf16.mxu0 0
        %334 = vmatpush1.bf16.msra.mxu0 0
        %335 = vmatprep.subr.bf16.mxu0 0
        %336 = vmatpush1.bf16.msra.mxu0 0
        %337 = vmatprep.subr.bf16.mxu0 0
        %338 = vmatpush1.bf16.msra.mxu0 0
        %339 = vmatprep.subr.bf16.mxu0 0
        %340 = vmatpush1.bf16.msra.mxu0 0
        %341 = vmatprep.subr.bf16.mxu0 0
        %342 = vmatpush1.bf16.msra.mxu0 0
        %343 = vmatprep.subr.bf16.mxu0 0
        %344 = vmatpush1.bf16.msra.mxu0 0
        %345 = vmatprep.subr.bf16.mxu0 0
        %346 = vmatpush1.bf16.msra.mxu0 0
        %347 = vmatprep.subr.bf16.mxu0 0
        %348 = vmatpush1.bf16.msra.mxu0 0
        %349 = vmatprep.subr.bf16.mxu0 0
        %350 = vmatpush1.bf16.msra.mxu0 0
        %351 = vmatprep.subr.bf16.mxu0 0
        %352 = vmatpush1.bf16.msra.mxu0 0
        %353 = vmatprep.subr.bf16.mxu0 0
        %354 = vmatpush1.bf16.msra.mxu0 0
        %355 = vmatprep.subr.bf16.mxu0 0
        %356 = vmatpush1.bf16.msra.mxu0 0
        %357 = vmatprep.subr.bf16.mxu0 0
        %358 = vmatpush1.bf16.msra.mxu0 0
        %359 = vmatprep.subr.bf16.mxu0 0
        %360 = vmatpush1.bf16.msra.mxu0 0
        %361 = vmatprep.mubr.bf16.mxu0 0
        %362 = vmatmul.mubr.bf16.gmra.mrb[0].mxu0 %v324
        %v363 = vpop.f32.mrb[0].mxu0
        %v364 = vadd.f32 0.0, %v363
        %v365 = vpop.f32.mrb[0].mxu0
        %v366 = vpop.f32.mrb[0].mxu0
        %v367 = vadd.f32 0.0, %v366
        %v368 = vpop.f32.mrb[0].mxu0
        %369 = vmatprep.mubr.bf16.mxu0 0
        %370 = vmatmul.mubr.bf16.gmra.mrb[0].mxu0 %v327
        %v371 = vpop.f32.mrb[0].mxu0
        %v372 = vadd.f32 0.0, %v371
        %v373 = vpop.f32.mrb[0].mxu0
        %v374 = vpop.f32.mrb[0].mxu0
        %v375 = vadd.f32 0.0, %v374
        %v376 = vpop.f32.mrb[0].mxu0
        %377 = vdwg.mxu0
        %v378 = vadd.f32 %v307, %v364
        %v379 = vadd.f32 %v310, %v367
        %v380 = vadd.f32 %v315, %v372
        %v381 = vadd.f32 %v318, %v375
        %v382 = vpack.c.bf16 %v181, %v180
        %v383 = vpack.c.bf16 %v183, %v182
        %v384 = vunpack.c.l.bf16 %v382
        %v385 = vunpack.c.h.bf16 %v382
        %v386 = vunpack.c.l.bf16 %v383
        %v387 = vunpack.c.h.bf16 %v383
        %v388 = vsub.f32 %v180, %v384
        %v389 = vsub.f32 %v181, %v385
        %v390 = vsub.f32 %v182, %v386
        %v391 = vsub.f32 %v183, %v387
        %v392 = vpack.c.bf16 %v389, %v388
        %v393 = vpack.c.bf16 %v391, %v390
        %v394 = vunpack.c.l.bf16 %v392
        %v395 = vunpack.c.h.bf16 %v392
        %v396 = vunpack.c.l.bf16 %v393
        %v397 = vunpack.c.h.bf16 %v393
        %v398 = vsub.f32 %v388, %v394
        %v399 = vsub.f32 %v389, %v395
        %v400 = vsub.f32 %v390, %v396
        %v401 = vsub.f32 %v391, %v397
        %404 = vrot.lane.b32.xlu0 %v392, 112
        %v405 = vpop.permute.xlu0 %404
        %406 = vrot.lane.b32.xlu0 %v393, 112
        %v407 = vpop.permute.xlu0 %406
        %v409 = vsel %vm210, %v405, 0
        %v412 = vsel %vm210, %v407, 0
        %414 = vmatprep.subr.bf16.mxu0 0
        %415 = vmatpush1.bf16.msra.mxu0 %v208
        %416 = vmatprep.subr.bf16.mxu0 0
        %417 = vmatpush1.bf16.msra.mxu0 0
        %418 = vmatprep.subr.bf16.mxu0 0
        %419 = vmatpush1.bf16.msra.mxu0 0
        %420 = vmatprep.subr.bf16.mxu0 0
        %421 = vmatpush1.bf16.msra.mxu0 0
        %422 = vmatprep.subr.bf16.mxu0 0
        %423 = vmatpush1.bf16.msra.mxu0 0
        %424 = vmatprep.subr.bf16.mxu0 0
        %425 = vmatpush1.bf16.msra.mxu0 0
        %426 = vmatprep.subr.bf16.mxu0 0
        %427 = vmatpush1.bf16.msra.mxu0 0
        %428 = vmatprep.subr.bf16.mxu0 0
        %429 = vmatpush1.bf16.msra.mxu0 0
        %430 = vmatprep.subr.bf16.mxu0 0
        %431 = vmatpush1.bf16.msra.mxu0 0
        %432 = vmatprep.subr.bf16.mxu0 0
        %433 = vmatpush1.bf16.msra.mxu0 0
        %434 = vmatprep.subr.bf16.mxu0 0
        %435 = vmatpush1.bf16.msra.mxu0 0
        %436 = vmatprep.subr.bf16.mxu0 0
        %437 = vmatpush1.bf16.msra.mxu0 0
        %438 = vmatprep.subr.bf16.mxu0 0
        %439 = vmatpush1.bf16.msra.mxu0 0
        %440 = vmatprep.subr.bf16.mxu0 0
        %441 = vmatpush1.bf16.msra.mxu0 0
        %442 = vmatprep.subr.bf16.mxu0 0
        %443 = vmatpush1.bf16.msra.mxu0 0
        %444 = vmatprep.subr.bf16.mxu0 0
        %445 = vmatpush1.bf16.msra.mxu0 0
        %446 = vmatprep.mubr.bf16.mxu0 0
        %447 = vmatmul.mubr.bf16.gmra.mrb[0].mxu0 %v409
        %v448 = vpop.f32.mrb[0].mxu0
        %v449 = vadd.f32 0.0, %v448
        %v450 = vpop.f32.mrb[0].mxu0
        %v451 = vpop.f32.mrb[0].mxu0
        %v452 = vadd.f32 0.0, %v451
        %v453 = vpop.f32.mrb[0].mxu0
        %454 = vmatprep.mubr.bf16.mxu0 0
        %455 = vmatmul.mubr.bf16.gmra.mrb[0].mxu0 %v412
        %v456 = vpop.f32.mrb[0].mxu0
        %v457 = vadd.f32 0.0, %v456
        %v458 = vpop.f32.mrb[0].mxu0
        %v459 = vpop.f32.mrb[0].mxu0
        %v460 = vadd.f32 0.0, %v459
        %v461 = vpop.f32.mrb[0].mxu0
        %462 = vdwg.mxu0
        %465 = vrot.lane.b32.xlu0 %v382, 112
        %v466 = vpop.permute.xlu0 %465
        %467 = vrot.lane.b32.xlu0 %v383, 112
        %v468 = vpop.permute.xlu0 %467
        %v470 = vsel %vm210, %v466, 0
        %v473 = vsel %vm210, %v468, 0
        %475 = vmatprep.subr.bf16.mxu0 0
        %476 = vmatpush1.bf16.msra.mxu0 %v208
        %477 = vmatprep.subr.bf16.mxu0 0
        %478 = vmatpush1.bf16.msra.mxu0 0
        %479 = vmatprep.subr.bf16.mxu0 0
        %480 = vmatpush1.bf16.msra.mxu0 0
        %481 = vmatprep.subr.bf16.mxu0 0
        %482 = vmatpush1.bf16.msra.mxu0 0
        %483 = vmatprep.subr.bf16.mxu0 0
        %484 = vmatpush1.bf16.msra.mxu0 0
        %485 = vmatprep.subr.bf16.mxu0 0
        %486 = vmatpush1.bf16.msra.mxu0 0
        %487 = vmatprep.subr.bf16.mxu0 0
        %488 = vmatpush1.bf16.msra.mxu0 0
        %489 = vmatprep.subr.bf16.mxu0 0
        %490 = vmatpush1.bf16.msra.mxu0 0
        %491 = vmatprep.subr.bf16.mxu0 0
        %492 = vmatpush1.bf16.msra.mxu0 0
        %493 = vmatprep.subr.bf16.mxu0 0
        %494 = vmatpush1.bf16.msra.mxu0 0
        %495 = vmatprep.subr.bf16.mxu0 0
        %496 = vmatpush1.bf16.msra.mxu0 0
        %497 = vmatprep.subr.bf16.mxu0 0
        %498 = vmatpush1.bf16.msra.mxu0 0
        %499 = vmatprep.subr.bf16.mxu0 0
        %500 = vmatpush1.bf16.msra.mxu0 0
        %501 = vmatprep.subr.bf16.mxu0 0
        %502 = vmatpush1.bf16.msra.mxu0 0
        %503 = vmatprep.subr.bf16.mxu0 0
        %504 = vmatpush1.bf16.msra.mxu0 0
        %505 = vmatprep.subr.bf16.mxu0 0
        %506 = vmatpush1.bf16.msra.mxu0 0
        %507 = vmatprep.mubr.bf16.mxu0 0
        %508 = vmatmul.mubr.bf16.gmra.mrb[0].mxu0 %v470
        %v509 = vpop.f32.mrb[0].mxu0
        %v510 = vadd.f32 %v449, %v509
        %v511 = vpop.f32.mrb[0].mxu0
        %v512 = vpop.f32.mrb[0].mxu0
        %v513 = vadd.f32 %v452, %v512
        %v514 = vpop.f32.mrb[0].mxu0
        %515 = vmatprep.mubr.bf16.mxu0 0
        %516 = vmatmul.mubr.bf16.gmra.mrb[0].mxu0 %v473
        %v517 = vpop.f32.mrb[0].mxu0
        %v518 = vadd.f32 %v457, %v517
        %v519 = vpop.f32.mrb[0].mxu0
        %v520 = vpop.f32.mrb[0].mxu0
        %v521 = vadd.f32 %v460, %v520
        %v522 = vpop.f32.mrb[0].mxu0
        %523 = vdwg.mxu0
        %v524 = vpack.c.bf16 %v399, %v398
        %v525 = vpack.c.bf16 %v401, %v400
        %528 = vrot.lane.b32.xlu0 %v524, 112
        %v529 = vpop.permute.xlu0 %528
        %530 = vrot.lane.b32.xlu0 %v525, 112
        %v531 = vpop.permute.xlu0 %530
        %v533 = vsel %vm210, %v529, 0
        %v536 = vsel %vm210, %v531, 0
        %538 = vmatprep.subr.bf16.mxu0 0
        %539 = vmatpush1.bf16.msra.mxu0 %v208
        %540 = vmatprep.subr.bf16.mxu0 0
        %541 = vmatpush1.bf16.msra.mxu0 0
        %542 = vmatprep.subr.bf16.mxu0 0
        %543 = vmatpush1.bf16.msra.mxu0 0
        %544 = vmatprep.subr.bf16.mxu0 0
        %545 = vmatpush1.bf16.msra.mxu0 0
        %546 = vmatprep.subr.bf16.mxu0 0
        %547 = vmatpush1.bf16.msra.mxu0 0
        %548 = vmatprep.subr.bf16.mxu0 0
        %549 = vmatpush1.bf16.msra.mxu0 0
        %550 = vmatprep.subr.bf16.mxu0 0
        %551 = vmatpush1.bf16.msra.mxu0 0
        %552 = vmatprep.subr.bf16.mxu0 0
        %553 = vmatpush1.bf16.msra.mxu0 0
        %554 = vmatprep.subr.bf16.mxu0 0
        %555 = vmatpush1.bf16.msra.mxu0 0
        %556 = vmatprep.subr.bf16.mxu0 0
        %557 = vmatpush1.bf16.msra.mxu0 0
        %558 = vmatprep.subr.bf16.mxu0 0
        %559 = vmatpush1.bf16.msra.mxu0 0
        %560 = vmatprep.subr.bf16.mxu0 0
        %561 = vmatpush1.bf16.msra.mxu0 0
        %562 = vmatprep.subr.bf16.mxu0 0
        %563 = vmatpush1.bf16.msra.mxu0 0
        %564 = vmatprep.subr.bf16.mxu0 0
        %565 = vmatpush1.bf16.msra.mxu0 0
        %566 = vmatprep.subr.bf16.mxu0 0
        %567 = vmatpush1.bf16.msra.mxu0 0
        %568 = vmatprep.subr.bf16.mxu0 0
        %569 = vmatpush1.bf16.msra.mxu0 0
        %570 = vmatprep.mubr.bf16.mxu0 0
        %571 = vmatmul.mubr.bf16.gmra.mrb[0].mxu0 %v533
        %v572 = vpop.f32.mrb[0].mxu0
        %v573 = vadd.f32 0.0, %v572
        %v574 = vpop.f32.mrb[0].mxu0
        %v575 = vpop.f32.mrb[0].mxu0
        %v576 = vadd.f32 0.0, %v575
        %v577 = vpop.f32.mrb[0].mxu0
        %578 = vmatprep.mubr.bf16.mxu0 0
        %579 = vmatmul.mubr.bf16.gmra.mrb[0].mxu0 %v536
        %v580 = vpop.f32.mrb[0].mxu0
        %v581 = vadd.f32 0.0, %v580
        %v582 = vpop.f32.mrb[0].mxu0
        %v583 = vpop.f32.mrb[0].mxu0
        %v584 = vadd.f32 0.0, %v583
        %v585 = vpop.f32.mrb[0].mxu0
        %586 = vdwg.mxu0
        %v587 = vadd.f32 %v510, %v573
        %v588 = vadd.f32 %v513, %v576
        %v589 = vadd.f32 %v518, %v581
        %v590 = vadd.f32 %v521, %v584
        %vm591 = vcmask 64512
        %592 = vst.msk [vmem:[%s133] sm:$0xff] %vm591, %v378
        %593 = vst.msk [vmem:[%s133 + $0x8] sm:$0xff] %vm591, %v379
        %594 = vst.msk [vmem:[%s133 + $0x10] sm:$0xff] %vm591, %v380
        %595 = vst.msk [vmem:[%s133 + $0x18] sm:$0xff] %vm591, %v381
        %600 = vrot.lane.b32.xlu0 %v378, 120
        %v601 = vpop.permute.xlu0 %600
        %602 = vrot.lane.b32.xlu0 %v379, 120
        %v603 = vpop.permute.xlu0 %602
        %604 = vrot.lane.b32.xlu0 %v380, 120
        %v605 = vpop.permute.xlu0 %604
        %606 = vrot.lane.b32.xlu0 %v381, 120
        %v607 = vpop.permute.xlu0 %606
        %s612 = scalar_lea.vmem %s133, 32 [#allocation2]
        %613 = vst.msk [vmem:[%s612] sm:$0xff] %vm591, %v601
        %614 = vst.msk [vmem:[%s612 + $0x8] sm:$0xff] %vm591, %v603
        %615 = vst.msk [vmem:[%s612 + $0x10] sm:$0xff] %vm591, %v605
        %616 = vst.msk [vmem:[%s612 + $0x18] sm:$0xff] %vm591, %v607
        %s617 = scalar_lea.vmem %s133, 64 [#allocation2]
        %618 = vst.msk [vmem:[%s617] sm:$0xff] %vm591, %v587
        %619 = vst.msk [vmem:[%s617 + $0x8] sm:$0xff] %vm591, %v588
        %620 = vst.msk [vmem:[%s617 + $0x10] sm:$0xff] %vm591, %v589
        %621 = vst.msk [vmem:[%s617 + $0x18] sm:$0xff] %vm591, %v590
        %626 = vrot.lane.b32.xlu0 %v587, 120
        %v627 = vpop.permute.xlu0 %626
        %628 = vrot.lane.b32.xlu0 %v588, 120
        %v629 = vpop.permute.xlu0 %628
        %630 = vrot.lane.b32.xlu0 %v589, 120
        %v631 = vpop.permute.xlu0 %630
        %632 = vrot.lane.b32.xlu0 %v590, 120
        %v633 = vpop.permute.xlu0 %632
        %s638 = scalar_lea.vmem %s133, 96 [#allocation2]
        %639 = vst.msk [vmem:[%s638] sm:$0xff] %vm591, %v627
        %640 = vst.msk [vmem:[%s638 + $0x8] sm:$0xff] %vm591, %v629
        %641 = vst.msk [vmem:[%s638 + $0x10] sm:$0xff] %vm591, %v631
        %642 = vst.msk [vmem:[%s638 + $0x18] sm:$0xff] %vm591, %v633
        %s643 = sand.u32 %s68, 1
        %s644 = sand.u32 %s68, 1
        %s645 = smul.addr %s644, 128
        %s646 = scalar_lea.vmem [#allocation2], %s645
        // Predicated region
        $region29: #{tpu_custom_call.1} parent=27 // pred_check
          %p647 = pneg %p78
        $region30: #{tpu_custom_call.1} parent=27 // pred_check_branch
          %649 = sbr.rel (%p647) target = $region32
        $region31: #{tpu_custom_call.1} parent=27 // pred_region
          %s650 = smul.u32 4, %s13
          %s651 = smul.addr %s650, 8
          %s652 = scalar_lea.vmem %s2, %s651
          // Predicated region
          $region33: #{tpu_custom_call.1} parent=31 // pred_check
            _
          $region34: #{tpu_custom_call.1} parent=31 // pred_check_branch
            %654 = sbr.rel (0) target = $region36
          $region35: #{tpu_custom_call.1} parent=31 // pred_region
            // Predicated region
            $region37: #{tpu_custom_call.1} parent=35 // pred_check
              _
            $region38: #{tpu_custom_call.1} parent=35 // pred_check_branch
              %656 = sbr.rel (0) target = $region40
            $region39: #{tpu_custom_call.1} parent=35 // pred_region
              // Predicated region
              $region52: #{tpu_custom_call.1} parent=39 // pred_check
                _
              $region53: #{tpu_custom_call.1} parent=39 // pred_check_branch
                %701 = sbr.rel (0) target = $region55
              $region54: #{tpu_custom_call.1} parent=39 // pred_region
                loop: start=0, step=1, limit=1
                $region56: #{tpu_custom_call.1} parent=54 // loop_pre_header
                  _
                $region57: #{tpu_custom_call.1} parent=54 // loop_header
                  %s703 = sphi 0, %s707
                  %p704 = scmp.ge.s32.totalorder %s703, 1
                  %s708 = sphi %s646, %s646
                  %s709 = sphi %s652, %s652
                $region58: #{tpu_custom_call.1} parent=54 // loop_header_branch
                  %706 = sbr.rel (%p704) target = $region62
                $region59: #{tpu_custom_call.1} parent=54 // loop_body
                  %v710 = vld [vmem:[%s708] sm:$0xff]
                  %711 = vst [vmem:[%s709] sm:$0xff] %v710
                  %v712 = vld [vmem:[%s708 + $0x8] sm:$0xff]
                  %713 = vst [vmem:[%s709 + $0x8] sm:$0xff] %v712
                  %v714 = vld [vmem:[%s708 + $0x10] sm:$0xff]
                  %715 = vst [vmem:[%s709 + $0x10] sm:$0xff] %v714
                  %v716 = vld [vmem:[%s708 + $0x18] sm:$0xff]
                  %717 = vst [vmem:[%s709 + $0x18] sm:$0xff] %v716
                  %v718 = vld [vmem:[%s708 + $0x20] sm:$0xff]
                  %719 = vst [vmem:[%s709 + $0x40] sm:$0xff] %v718
                  %v720 = vld [vmem:[%s708 + $0x28] sm:$0xff]
                  %721 = vst [vmem:[%s709 + $0x48] sm:$0xff] %v720
                  %v722 = vld [vmem:[%s708 + $0x30] sm:$0xff]
                  %723 = vst [vmem:[%s709 + $0x50] sm:$0xff] %v722
                  %v724 = vld [vmem:[%s708 + $0x38] sm:$0xff]
                  %725 = vst [vmem:[%s709 + $0x58] sm:$0xff] %v724
                  %v726 = vld [vmem:[%s708 + $0x40] sm:$0xff]
                  %727 = vst [vmem:[%s709 + $0x80] sm:$0xff] %v726
                  %v728 = vld [vmem:[%s708 + $0x48] sm:$0xff]
                  %729 = vst [vmem:[%s709 + $0x88] sm:$0xff] %v728
                  %v730 = vld [vmem:[%s708 + $0x50] sm:$0xff]
                  %731 = vst [vmem:[%s709 + $0x90] sm:$0xff] %v730
                  %v732 = vld [vmem:[%s708 + $0x58] sm:$0xff]
                  %733 = vst [vmem:[%s709 + $0x98] sm:$0xff] %v732
                  %v734 = vld [vmem:[%s708 + $0x60] sm:$0xff]
                  %735 = vst [vmem:[%s709 + $0xc0] sm:$0xff] %v734
                  %v736 = vld [vmem:[%s708 + $0x68] sm:$0xff]
                  %737 = vst [vmem:[%s709 + $0xc8] sm:$0xff] %v736
                  %v738 = vld [vmem:[%s708 + $0x70] sm:$0xff]
                  %739 = vst [vmem:[%s709 + $0xd0] sm:$0xff] %v738
                  %v740 = vld [vmem:[%s708 + $0x78] sm:$0xff]
                  %741 = vst [vmem:[%s709 + $0xd8] sm:$0xff] %v740
                $region60: #{tpu_custom_call.1} parent=54 // loop_footer
                  %s707 = sadd.s32 1, %s703
                $region61: #{tpu_custom_call.1} parent=54 // loop_footer_branch
                  %702 = sbr.rel target = $region57
                $region62: #{tpu_custom_call.1} parent=54 // loop_exit
                  _
              $region55: #{tpu_custom_call.1} parent=39 // pred_fallthru
                _
              // Predicated region
              $region63: #{tpu_custom_call.1} parent=39 // pred_check
                _
              $region64: #{tpu_custom_call.1} parent=39 // pred_check_branch
                %743 = sbr.rel target = $region66
              $region65: #{tpu_custom_call.1} parent=39 // pred_region
                _
              $region66: #{tpu_custom_call.1} parent=39 // pred_fallthru
                _
            $region40: #{tpu_custom_call.1} parent=35 // pred_fallthru
              _
            // Predicated region
            $region41: #{tpu_custom_call.1} parent=35 // pred_check
              _
            $region42: #{tpu_custom_call.1} parent=35 // pred_check_branch
              %658 = sbr.rel target = $region44
            $region43: #{tpu_custom_call.1} parent=35 // pred_region
              loop: start=0, step=1, limit=1
              $region45: #{tpu_custom_call.1} parent=43 // loop_pre_header
                _
              $region46: #{tpu_custom_call.1} parent=43 // loop_header
                %s661 = sphi 0, %s665
                %p662 = scmp.ge.s32.totalorder %s661, 1
                %s666 = sphi %s646, %s646
                %s667 = sphi %s652, %s652
              $region47: #{tpu_custom_call.1} parent=43 // loop_header_branch
                %664 = sbr.rel (%p662) target = $region51
              $region48: #{tpu_custom_call.1} parent=43 // loop_body
                %v668 = vld [vmem:[%s666] sm:$0xff]
                %669 = vst [vmem:[%s667] sm:$0xff] %v668
                %v670 = vld [vmem:[%s666 + $0x8] sm:$0xff]
                %671 = vst [vmem:[%s667 + $0x8] sm:$0xff] %v670
                %v672 = vld [vmem:[%s666 + $0x10] sm:$0xff]
                %673 = vst [vmem:[%s667 + $0x10] sm:$0xff] %v672
                %v674 = vld [vmem:[%s666 + $0x18] sm:$0xff]
                %675 = vst [vmem:[%s667 + $0x18] sm:$0xff] %v674
                %v676 = vld [vmem:[%s666 + $0x20] sm:$0xff]
                %677 = vst [vmem:[%s667 + $0x40] sm:$0xff] %v676
                %v678 = vld [vmem:[%s666 + $0x28] sm:$0xff]
                %679 = vst [vmem:[%s667 + $0x48] sm:$0xff] %v678
                %v680 = vld [vmem:[%s666 + $0x30] sm:$0xff]
                %681 = vst [vmem:[%s667 + $0x50] sm:$0xff] %v680
                %v682 = vld [vmem:[%s666 + $0x38] sm:$0xff]
                %683 = vst [vmem:[%s667 + $0x58] sm:$0xff] %v682
                %v684 = vld [vmem:[%s666 + $0x40] sm:$0xff]
                %685 = vst [vmem:[%s667 + $0x80] sm:$0xff] %v684
                %v686 = vld [vmem:[%s666 + $0x48] sm:$0xff]
                %687 = vst [vmem:[%s667 + $0x88] sm:$0xff] %v686
                %v688 = vld [vmem:[%s666 + $0x50] sm:$0xff]
                %689 = vst [vmem:[%s667 + $0x90] sm:$0xff] %v688
                %v690 = vld [vmem:[%s666 + $0x58] sm:$0xff]
                %691 = vst [vmem:[%s667 + $0x98] sm:$0xff] %v690
                %v692 = vld [vmem:[%s666 + $0x60] sm:$0xff]
                %693 = vst [vmem:[%s667 + $0xc0] sm:$0xff] %v692
                %v694 = vld [vmem:[%s666 + $0x68] sm:$0xff]
                %695 = vst [vmem:[%s667 + $0xc8] sm:$0xff] %v694
                %v696 = vld [vmem:[%s666 + $0x70] sm:$0xff]
                %697 = vst [vmem:[%s667 + $0xd0] sm:$0xff] %v696
                %v698 = vld [vmem:[%s666 + $0x78] sm:$0xff]
                %699 = vst [vmem:[%s667 + $0xd8] sm:$0xff] %v698
              $region49: #{tpu_custom_call.1} parent=43 // loop_footer
                %s665 = sadd.s32 1, %s661
              $region50: #{tpu_custom_call.1} parent=43 // loop_footer_branch
                %660 = sbr.rel target = $region46
              $region51: #{tpu_custom_call.1} parent=43 // loop_exit
                _
            $region44: #{tpu_custom_call.1} parent=35 // pred_fallthru
              _
          $region36: #{tpu_custom_call.1} parent=31 // pred_fallthru
            _
          %744 = vnop
        $region32: #{tpu_custom_call.1} parent=27 // pred_fallthru
          _
      $region28: #{tpu_custom_call.1} parent=5 // pred_fallthru
        _
      %p745 = scmp.le.s32.totalorder 2, %s8
      // Predicated region
      $region67: #{tpu_custom_call.1} parent=5 // pred_check
        %p746 = pneg %p745
      $region68: #{tpu_custom_call.1} parent=5 // pred_check_branch
        %748 = sbr.rel (%p746) target = $region70
      $region69: #{tpu_custom_call.1} parent=5 // pred_region
        %s749 = ssub.s32 %s8, 2
        // Predicated region
        $region71: #{tpu_custom_call.1} parent=69 // pred_check
          %p750 = pneg %p84
        $region72: #{tpu_custom_call.1} parent=69 // pred_check_branch
          %752 = sbr.rel (%p750) target = $region74
        $region73: #{tpu_custom_call.1} parent=69 // pred_region
          %s753 = sand.u32 %s69, 1
          %s754 = sand.u32 %s69, 1
          %s755 = smul.addr %s754, 128
          %s756 = scalar_lea.vmem [#allocation2], %s755
        $region74: #{tpu_custom_call.1} parent=69 // pred_fallthru
          _
      $region70: #{tpu_custom_call.1} parent=5 // pred_fallthru
        _
    $region6: #{tpu_custom_call.1} parent=1 // loop_footer
      %s12 = sadd.s32 1, %s8
    $region7: #{tpu_custom_call.1} parent=1 // loop_footer_branch
      %7 = sbr.rel target = $region3
    $region8: #{tpu_custom_call.1} parent=1 // loop_exit
      _

</llo_original>
